<compile_context>
chip_gen: v6e
topology: v6e:2x2x1
jax: 0.10.0
libtpu: 0.0.40
codegen_flags: <defaults>
</compile_context>

<pallas_src>
import math

import jax
import jax.numpy as jnp
from jax import lax
from jax.experimental import pallas as pl
from jax.experimental.pallas import tpu as pltpu

_MIB = 1024 * 1024


def _pick_tile(dim, preferred):
    """Largest preferred tile that evenly divides `dim`, else the full dim."""
    for t in preferred:
        if t <= dim and dim % t == 0:
            return t
    return dim


def _vmem_limit(bytes_needed):
    # Raise the scoped-VMEM limit only as much as the tiles need; clamp to 64 MiB
    # so the same code stays legal on v7x (64 MiB/TC physical).  On v5e/v6e
    # (128 MiB physical) this could be raised further for even bigger tiles.
    return int(min(max(bytes_needed, 32 * _MIB), 64 * _MIB))


# ----------------------------- tiled linear kernel ----------------------------
def _linear_kernel(x_ref, w_ref, b_ref, o_ref, acc_ref):
    # y = x @ W^T + b (matches torch.nn.Linear).  Contracting the last dim of
    # both operands feeds the MXU directly -> no XLU transpose of the weight tile.
    @pl.when(pl.program_id(2) == 0)
    def _():
        acc_ref[...] = jnp.zeros_like(acc_ref)

    acc_ref[...] += lax.dot_general(
        x_ref[...], w_ref[...],
        dimension_numbers=(((1,), (1,)), ((), ())),
        preferred_element_type=jnp.float32,
    )

    @pl.when(pl.program_id(2) == pl.num_programs(2) - 1)
    def _():
        o_ref[...] = acc_ref[...] + b_ref[...]


def linear(x, w, b):
    """x: (M, K), w: (N, K), b: (N,) -> (M, N), float32."""
    M, K = x.shape
    N, _ = w.shape
    # MXU-friendly tiles (256-oriented for v6e/v7x; 128 also fine on v5e); fall
    # back to full dims for small / non-divisible sizes (the toy config below).
    tm = _pick_tile(M, (512, 256, 128))
    tn = _pick_tile(N, (512, 256, 128))
    tk = _pick_tile(K, (512, 256, 128))
    grid = (M // tm, N // tn, K // tk)

    blk_bytes = 4 * (2 * (tm * tk + tn * tk + tn + tm * tn) + tm * tn)
    return pl.pallas_call(
        _linear_kernel,
        out_shape=jax.ShapeDtypeStruct((M, N), jnp.float32),
        grid=grid,
        in_specs=[
            pl.BlockSpec((tm, tk), lambda i, j, k: (i, k)),
            pl.BlockSpec((tn, tk), lambda i, j, k: (j, k)),
            pl.BlockSpec((1, tn), lambda i, j, k: (0, j)),
        ],
        out_specs=pl.BlockSpec((tm, tn), lambda i, j, k: (i, j)),
        scratch_shapes=[pltpu.VMEM((tm, tn), jnp.float32)],
        compiler_params=pltpu.CompilerParams(
            dimension_semantics=("parallel", "parallel", "arbitrary"),
            vmem_limit_bytes=_vmem_limit(blk_bytes),
        ),
    )(x, w, b.reshape(1, N))


# ------------------------------ attention kernel ------------------------------
def _attn_kernel(q_ref, k_ref, v_ref, att1_ref, y_ref):
    q = q_ref[...]            # (tq, D)
    k = k_ref[...]            # (T, D)
    v = v_ref[...]            # (T, D)
    tq, D = q.shape
    T = k.shape[0]

    # Fold 1/sqrt(D) into q: tq*D multiplies instead of tq*T on the score tile.
    s = lax.dot_general(
        q * (1.0 / math.sqrt(D)), k,
        dimension_numbers=(((1,), (1,)), ((), ())),   # q @ k^T without transpose
        preferred_element_type=jnp.float32,
    )                                                  # (tq, T)
    att1_ref[...] = s          # pre-mask scaled scores (second return value)

    # Causal mask on absolute positions; large finite negative instead of -inf
    # so a fully-masked (padding) row would not produce NaN.
    q0 = pl.program_id(1) * tq
    row = q0 + lax.broadcasted_iota(jnp.int32, (tq, T), 0)
    col = lax.broadcasted_iota(jnp.int32, (tq, T), 1)
    masked = jnp.where(col <= row, s, -1e30)

    m = jnp.max(masked, axis=-1, keepdims=True)
    e = jnp.exp(masked - m)                            # unnormalized probs
    l = jnp.sum(e, axis=-1, keepdims=True)             # (tq, 1)

    # Defer the normalization onto the (tq, D) output (not the (tq, T) scores);
    # reciprocal runs on the EUP slot.
    y = jnp.dot(e, v, preferred_element_type=jnp.float32)
    y_ref[...] = y * pl.reciprocal(l, approx=True)


def attention_core(q, k, v):
    """q, k, v: (BH, T, D) -> (att1: (BH, T, T), y: (BH, T, D))."""
    BH, T, D = q.shape
    # Query tile: caps live score state at tq*T and lets att1 writeback pipeline
    # against compute; 256 targets the v6e/v7x MXU, falls back to full T for
    # small configs (toy shapes below).
    tq = _pick_tile(T, (256, 128))
    grid = (BH, T // tq)

    # Leading (B*H) dim squeezed via `None` -> 2-D refs inside the kernel.
    q_spec = pl.BlockSpec((None, tq, D), lambda bh, qi: (bh, qi, 0))
    kv_spec = pl.BlockSpec((None, T, D), lambda bh, qi: (bh, 0, 0))  # resident over qi
    att_spec = pl.BlockSpec((None, tq, T), lambda bh, qi: (bh, qi, 0))
    # TODO(synk): for real configs with D < 128, group G heads per block so the
    # y store is a lane-dense (tq, G*D >= 128) slab instead of a masked vst.
    y_spec = pl.BlockSpec((None, tq, D), lambda bh, qi: (bh, qi, 0))

    blk_bytes = 4 * 2 * (tq * D + 2 * T * D + tq * T + tq * D)
    return pl.pallas_call(
        _attn_kernel,
        out_shape=(
            jax.ShapeDtypeStruct((BH, T, T), jnp.float32),
            jax.ShapeDtypeStruct((BH, T, D), jnp.float32),
        ),
        grid=grid,
        in_specs=[q_spec, kv_spec, kv_spec],
        out_specs=(att_spec, y_spec),
        compiler_params=pltpu.CompilerParams(
            dimension_semantics=("parallel", "arbitrary"),
            vmem_limit_bytes=_vmem_limit(blk_bytes),
        ),
    )(q, k, v)


# -------------------------------- full module ----------------------------------
def attention_forward(x, params, n_head):
    """Reproduces Attention.forward: returns (c_proj(att @ v), att1)."""
    B, T, C = x.shape
    D = C // n_head

    # c_attn
    qkv = linear(x.reshape(B * T, C), params["w_attn"], params["b_attn"])  # (B*T, 3C)
    qkv = qkv.reshape(B, T, 3 * C)
    q, k, v = jnp.split(qkv, 3, axis=2)

    def to_heads(t):  # (B, T, C) -> (B*H, T, D)
        return t.reshape(B, T, n_head, D).transpose(0, 2, 1, 3).reshape(B * n_head, T, D)

    att1, y = attention_core(to_heads(q), to_heads(k), to_heads(v))
    att1 = att1.reshape(B, n_head, T, T)

    # (B*H, T, D) -> (B, T, C)
    y = y.reshape(B, n_head, T, D).transpose(0, 2, 1, 3).reshape(B * T, C)

    # c_proj
    out = linear(y, params["w_proj"], params["b_proj"])
    return out.reshape(B, T, C), att1


# --------------------------------- reference ------------------------------------
def attention_reference(x, params, n_head):
    B, T, C = x.shape
    D = C // n_head
    qkv = x.reshape(B * T, C) @ params["w_attn"].T + params["b_attn"]
    qkv = qkv.reshape(B, T, 3 * C)
    q, k, v = jnp.split(qkv, 3, axis=2)
    q = q.reshape(B, T, n_head, D).transpose(0, 2, 1, 3)
    k = k.reshape(B, T, n_head, D).transpose(0, 2, 1, 3)
    v = v.reshape(B, T, n_head, D).transpose(0, 2, 1, 3)
    att1 = jnp.einsum("bhtd,bhsd->bhts", q, k) * (1.0 / math.sqrt(D))
    mask = jnp.tril(jnp.ones((T, T), dtype=bool))
    att = jnp.where(mask[None, None], att1, -jnp.inf)
    att = jax.nn.softmax(att, axis=-1)
    y = jnp.einsum("bhts,bhsd->bhtd", att, v).transpose(0, 2, 1, 3).reshape(B, T, C)
    out = y.reshape(B * T, C) @ params["w_proj"].T + params["b_proj"]
    return out.reshape(B, T, C), att1


# ----------------------------------- main ----------------------------------------
if __name__ == "__main__":
    # small config consistent with the module
    B, T = 2, 8            # batch, sequence length (block_size >= T)
    n_embd, n_head = 32, 4

    key = jax.random.PRNGKey(0)
    kx, kwa, kba, kwp, kbp = jax.random.split(key, 5)

    x = jax.random.normal(kx, (B, T, n_embd), dtype=jnp.float32)
    params = {
        "w_attn": 0.02 * jax.random.normal(kwa, (3 * n_embd, n_embd), jnp.float32),
        "b_attn": 0.02 * jax.random.normal(kba, (3 * n_embd,), jnp.float32),
        "w_proj": 0.02 * jax.random.normal(kwp, (n_embd, n_embd), jnp.float32),
        "b_proj": 0.02 * jax.random.normal(kbp, (n_embd,), jnp.float32),
    }

    out, att1 = jax.jit(attention_forward, static_argnums=2)(x, params, n_head)
    jax.block_until_ready((out, att1))

    ref_out, ref_att1 = attention_reference(x, params, n_head)
    # att1 is exact up to scale-folding ULPs; out additionally carries the EUP
    # approx-reciprocal error from the deferred softmax normalization.
    assert jnp.allclose(att1, ref_att1, atol=1e-5, rtol=1e-5)
    assert jnp.allclose(out, ref_out, atol=1e-4, rtol=1e-4)

    print("KERNEL_OK")
</pallas_src>

<mosaic_0001>
module attributes {stable_mosaic.version = 11 : i64} {
  func.func @_linear_kernel(%arg0: i32, %arg1: i32, %arg2: i32, %arg3: memref<16x32xf32, #tpu.memory_space<vmem>>, %arg4: memref<96x32xf32, #tpu.memory_space<vmem>>, %arg5: memref<1x96xf32, #tpu.memory_space<vmem>>, %arg6: memref<16x96xf32, #tpu.memory_space<vmem>>, %arg7: memref<16x96xf32, #tpu.memory_space<vmem>>) attributes {dimension_semantics = [#tpu.dimension_semantics<parallel>, #tpu.dimension_semantics<parallel>, #tpu.dimension_semantics<arbitrary>], iteration_bounds = array<i64: 1, 1, 1>, scalar_prefetch = 0 : i64, scratch_operands = 1 : i64, tpu.core_type = #tpu.core_type<tc>, window_params = [{transform_indices = @transform_0, window_bounds = array<i64: 16, 32>}, {transform_indices = @transform_1, window_bounds = array<i64: 96, 32>}, {transform_indices = @transform_2, window_bounds = array<i64: 1, 96>}, {transform_indices = @transform_3, window_bounds = array<i64: 16, 96>}]} {
    %c0_i32 = arith.constant 0 : i32
    %0 = arith.cmpi eq, %arg2, %c0_i32 : i32
    %1 = arith.extui %0 : i1 to i32
    %c0_i32_0 = arith.constant 0 : i32
    %2 = arith.cmpi ne, %1, %c0_i32_0 : i32
    scf.if %2 {
      %cst_10 = arith.constant 0.000000e+00 : f32
      %12 = vector.broadcast %cst_10 : f32 to vector<16x96xf32>
      %c0_11 = arith.constant 0 : index
      %c0_12 = arith.constant 0 : index
      %13 = vector.load %arg7[%c0_11, %c0_12] : memref<16x96xf32, #tpu.memory_space<vmem>>, vector<16x96xf32>
      tpu.vector_store %arg7[%c0_11, %c0_12], %12 {strides = array<i32>} : memref<16x96xf32, #tpu.memory_space<vmem>>, vector<16x96xf32>,
    } else {
    }
    %c0 = arith.constant 0 : index
    %c0_1 = arith.constant 0 : index
    %3 = vector.load %arg7[%c0, %c0_1] : memref<16x96xf32, #tpu.memory_space<vmem>>, vector<16x96xf32>
    %c0_2 = arith.constant 0 : index
    %c0_3 = arith.constant 0 : index
    %4 = vector.load %arg3[%c0_2, %c0_3] : memref<16x32xf32, #tpu.memory_space<vmem>>, vector<16x32xf32>
    %c0_4 = arith.constant 0 : index
    %c0_5 = arith.constant 0 : index
    %5 = vector.load %arg4[%c0_4, %c0_5] : memref<96x32xf32, #tpu.memory_space<vmem>>, vector<96x32xf32>
    %cst = arith.constant dense<0.000000e+00> : vector<16x96xf32>
    %6 = tpu.matmul %4, %5, %cst {dimension_numbers = #tpu.dot_dimension_numbers<[1], [1], [0], [0], [0, 0, 1, 0], [], []>} : vector<16x32xf32>, vector<96x32xf32>, vector<16x96xf32> -> vector<16x96xf32>
    %7 = arith.addf %3, %6 : vector<16x96xf32>
    %c0_6 = arith.constant 0 : index
    %c0_7 = arith.constant 0 : index
    %8 = vector.load %arg7[%c0_6, %c0_7] : memref<16x96xf32, #tpu.memory_space<vmem>>, vector<16x96xf32>
    tpu.vector_store %arg7[%c0_6, %c0_7], %7 {strides = array<i32>} : memref<16x96xf32, #tpu.memory_space<vmem>>, vector<16x96xf32>,
    %c0_i32_8 = arith.constant 0 : i32
    %9 = arith.cmpi eq, %arg2, %c0_i32_8 : i32
    %10 = arith.extui %9 : i1 to i32
    %c0_i32_9 = arith.constant 0 : i32
    %11 = arith.cmpi ne, %10, %c0_i32_9 : i32
    scf.if %11 {
      %c0_10 = arith.constant 0 : index
      %c0_11 = arith.constant 0 : index
      %12 = vector.load %arg7[%c0_10, %c0_11] : memref<16x96xf32, #tpu.memory_space<vmem>>, vector<16x96xf32>
      %c0_12 = arith.constant 0 : index
      %c0_13 = arith.constant 0 : index
      %13 = vector.load %arg5[%c0_12, %c0_13] : memref<1x96xf32, #tpu.memory_space<vmem>>, vector<1x96xf32>
      %14 = vector.broadcast %13 : vector<1x96xf32> to vector<16x96xf32>
      %15 = arith.addf %12, %14 : vector<16x96xf32>
      %c0_14 = arith.constant 0 : index
      %c0_15 = arith.constant 0 : index
      %16 = vector.load %arg6[%c0_14, %c0_15] : memref<16x96xf32, #tpu.memory_space<vmem>>, vector<16x96xf32>
      tpu.vector_store %arg6[%c0_14, %c0_15], %15 {strides = array<i32>} : memref<16x96xf32, #tpu.memory_space<vmem>>, vector<16x96xf32>,
    } else {
    }
    return
  }
  func.func @transform_0(%arg0: i32, %arg1: i32, %arg2: i32) -> (i32, i32) {
    %c0_i32 = arith.constant 0 : i32
    return %arg0, %arg2 : i32, i32
  }
  func.func @transform_1(%arg0: i32, %arg1: i32, %arg2: i32) -> (i32, i32) {
    %c0_i32 = arith.constant 0 : i32
    return %arg1, %arg2 : i32, i32
  }
  func.func @transform_2(%arg0: i32, %arg1: i32, %arg2: i32) -> (i32, i32) {
    %c0_i32 = arith.constant 0 : i32
    %c0_i32_0 = arith.constant 0 : i32
    return %c0_i32, %arg1 : i32, i32
  }
  func.func @transform_3(%arg0: i32, %arg1: i32, %arg2: i32) -> (i32, i32) {
    %c0_i32 = arith.constant 0 : i32
    return %arg0, %arg1 : i32, i32
  }
}

module attributes {stable_mosaic.version = 11 : i64} {
  func.func @_attn_kernel(%arg0: i32, %arg1: i32, %arg2: memref<1x8x8xf32, #tpu.memory_space<vmem>>, %arg3: memref<1x8x8xf32, #tpu.memory_space<vmem>>, %arg4: memref<1x8x8xf32, #tpu.memory_space<vmem>>, %arg5: memref<1x8x8xf32, #tpu.memory_space<vmem>>, %arg6: memref<1x8x8xf32, #tpu.memory_space<vmem>>) attributes {dimension_semantics = [#tpu.dimension_semantics<parallel>, #tpu.dimension_semantics<arbitrary>], iteration_bounds = array<i64: 8, 1>, scalar_prefetch = 0 : i64, scratch_operands = 0 : i64, tpu.core_type = #tpu.core_type<tc>, window_params = [{transform_indices = @transform_0, window_bounds = array<i64: 1, 8, 8>}, {transform_indices = @transform_1, window_bounds = array<i64: 1, 8, 8>}, {transform_indices = @transform_2, window_bounds = array<i64: 1, 8, 8>}, {transform_indices = @transform_3, window_bounds = array<i64: 1, 8, 8>}, {transform_indices = @transform_4, window_bounds = array<i64: 1, 8, 8>}]} {
    %c0 = arith.constant 0 : index
    %c0_0 = arith.constant 0 : index
    %c0_1 = arith.constant 0 : index
    %0 = vector.load %arg2[%c0, %c0_0, %c0_1] : memref<1x8x8xf32, #tpu.memory_space<vmem>>, vector<1x8x8xf32>
    %1 = vector.shape_cast %0 : vector<1x8x8xf32> to vector<8x8xf32>
    %c0_2 = arith.constant 0 : index
    %c0_3 = arith.constant 0 : index
    %c0_4 = arith.constant 0 : index
    %2 = vector.load %arg3[%c0_2, %c0_3, %c0_4] : memref<1x8x8xf32, #tpu.memory_space<vmem>>, vector<1x8x8xf32>
    %3 = vector.shape_cast %2 : vector<1x8x8xf32> to vector<8x8xf32>
    %c0_5 = arith.constant 0 : index
    %c0_6 = arith.constant 0 : index
    %c0_7 = arith.constant 0 : index
    %4 = vector.load %arg4[%c0_5, %c0_6, %c0_7] : memref<1x8x8xf32, #tpu.memory_space<vmem>>, vector<1x8x8xf32>
    %5 = vector.shape_cast %4 : vector<1x8x8xf32> to vector<8x8xf32>
    %cst = arith.constant 0.353553385 : f32
    %6 = vector.broadcast %cst : f32 to vector<8x8xf32>
    %7 = arith.mulf %1, %6 : vector<8x8xf32>
    %cst_8 = arith.constant dense<0.000000e+00> : vector<8x8xf32>
    %8 = tpu.matmul %7, %3, %cst_8 {dimension_numbers = #tpu.dot_dimension_numbers<[1], [1], [0], [0], [0, 0, 1, 0], [], []>} : vector<8x8xf32>, vector<8x8xf32>, vector<8x8xf32> -> vector<8x8xf32>
    %c0_9 = arith.constant 0 : index
    %c0_10 = arith.constant 0 : index
    %c0_11 = arith.constant 0 : index
    %9 = vector.load %arg5[%c0_9, %c0_10, %c0_11] : memref<1x8x8xf32, #tpu.memory_space<vmem>>, vector<1x8x8xf32>
    %10 = vector.shape_cast %9 : vector<1x8x8xf32> to vector<8x8xf32>
    %11 = vector.shape_cast %8 : vector<8x8xf32> to vector<1x8x8xf32>
    tpu.vector_store %arg5[%c0_9, %c0_10, %c0_11], %11 {strides = array<i32>} : memref<1x8x8xf32, #tpu.memory_space<vmem>>, vector<1x8x8xf32>,
    %c8_i32 = arith.constant 8 : i32
    %12 = arith.muli %arg1, %c8_i32 : i32
    %13 = tpu.iota {dimensions = array<i32: 0>} : vector<8x8xi32>
    %14 = vector.broadcast %12 : i32 to vector<8x8xi32>
    %15 = arith.addi %14, %13 : vector<8x8xi32>
    %16 = tpu.iota {dimensions = array<i32: 1>} : vector<8x8xi32>
    %17 = arith.cmpi sle, %16, %15 : vector<8x8xi32>
    %cst_12 = arith.constant -1.000000e+30 : f32
    %18 = vector.broadcast %cst_12 : f32 to vector<8x8xf32>
    %19 = arith.select %17, %8, %18 : vector<8x8xi1>, vector<8x8xf32>
    %cst_13 = arith.constant dense<0xFF800000> : vector<8xf32>
    %20 = vector.multi_reduction <maximumf>, %19, %cst_13 [1] : vector<8x8xf32> to vector<8xf32>
    %21 = vector.shape_cast %20 : vector<8xf32> to vector<8x1xf32>
    %22 = vector.broadcast %21 : vector<8x1xf32> to vector<8x8xf32>
    %23 = arith.subf %19, %22 : vector<8x8xf32>
    %24 = math.exp %23 : vector<8x8xf32>
    %cst_14 = arith.constant dense<0.000000e+00> : vector<8xf32>
    %25 = vector.multi_reduction <add>, %24, %cst_14 [1] : vector<8x8xf32> to vector<8xf32>
    %26 = vector.shape_cast %25 : vector<8xf32> to vector<8x1xf32>
    %cst_15 = arith.constant dense<0.000000e+00> : vector<8x8xf32>
    %27 = tpu.matmul %24, %5, %cst_15 {dimension_numbers = #tpu.dot_dimension_numbers<[1], [0], [0], [1], [0, 0, 1, 1], [], []>} : vector<8x8xf32>, vector<8x8xf32>, vector<8x8xf32> -> vector<8x8xf32>
    %28 = tpu.reciprocal %26 {approx = true} : vector<8x1xf32> -> vector<8x1xf32>
    %29 = vector.broadcast %28 : vector<8x1xf32> to vector<8x8xf32>
    %30 = arith.mulf %27, %29 : vector<8x8xf32>
    %c0_16 = arith.constant 0 : index
    %c0_17 = arith.constant 0 : index
    %c0_18 = arith.constant 0 : index
    %31 = vector.load %arg6[%c0_16, %c0_17, %c0_18] : memref<1x8x8xf32, #tpu.memory_space<vmem>>, vector<1x8x8xf32>
    %32 = vector.shape_cast %31 : vector<1x8x8xf32> to vector<8x8xf32>
    %33 = vector.shape_cast %30 : vector<8x8xf32> to vector<1x8x8xf32>
    tpu.vector_store %arg6[%c0_16, %c0_17, %c0_18], %33 {strides = array<i32>} : memref<1x8x8xf32, #tpu.memory_space<vmem>>, vector<1x8x8xf32>,
    return
  }
  func.func @transform_0(%arg0: i32, %arg1: i32) -> (i32, i32, i32) {
    %c0_i32 = arith.constant 0 : i32
    %c0_i32_0 = arith.constant 0 : i32
    return %arg0, %arg1, %c0_i32 : i32, i32, i32
  }
  func.func @transform_1(%arg0: i32, %arg1: i32) -> (i32, i32, i32) {
    %c0_i32 = arith.constant 0 : i32
    %c0_i32_0 = arith.constant 0 : i32
    %c0_i32_1 = arith.constant 0 : i32
    return %arg0, %c0_i32, %c0_i32_0 : i32, i32, i32
  }
  func.func @transform_2(%arg0: i32, %arg1: i32) -> (i32, i32, i32) {
    %c0_i32 = arith.constant 0 : i32
    %c0_i32_0 = arith.constant 0 : i32
    %c0_i32_1 = arith.constant 0 : i32
    return %arg0, %c0_i32, %c0_i32_0 : i32, i32, i32
  }
  func.func @transform_3(%arg0: i32, %arg1: i32) -> (i32, i32, i32) {
    %c0_i32 = arith.constant 0 : i32
    %c0_i32_0 = arith.constant 0 : i32
    return %arg0, %arg1, %c0_i32 : i32, i32, i32
  }
  func.func @transform_4(%arg0: i32, %arg1: i32) -> (i32, i32, i32) {
    %c0_i32 = arith.constant 0 : i32
    %c0_i32_0 = arith.constant 0 : i32
    return %arg0, %arg1, %c0_i32 : i32, i32, i32
  }
}

module attributes {stable_mosaic.version = 11 : i64} {
  func.func @_linear_kernel(%arg0: i32, %arg1: i32, %arg2: i32, %arg3: memref<16x32xf32, #tpu.memory_space<vmem>>, %arg4: memref<32x32xf32, #tpu.memory_space<vmem>>, %arg5: memref<1x32xf32, #tpu.memory_space<vmem>>, %arg6: memref<16x32xf32, #tpu.memory_space<vmem>>, %arg7: memref<16x32xf32, #tpu.memory_space<vmem>>) attributes {dimension_semantics = [#tpu.dimension_semantics<parallel>, #tpu.dimension_semantics<parallel>, #tpu.dimension_semantics<arbitrary>], iteration_bounds = array<i64: 1, 1, 1>, scalar_prefetch = 0 : i64, scratch_operands = 1 : i64, tpu.core_type = #tpu.core_type<tc>, window_params = [{transform_indices = @transform_0, window_bounds = array<i64: 16, 32>}, {transform_indices = @transform_1, window_bounds = array<i64: 32, 32>}, {transform_indices = @transform_2, window_bounds = array<i64: 1, 32>}, {transform_indices = @transform_3, window_bounds = array<i64: 16, 32>}]} {
    %c0_i32 = arith.constant 0 : i32
    %0 = arith.cmpi eq, %arg2, %c0_i32 : i32
    %1 = arith.extui %0 : i1 to i32
    %c0_i32_0 = arith.constant 0 : i32
    %2 = arith.cmpi ne, %1, %c0_i32_0 : i32
    scf.if %2 {
      %cst_10 = arith.constant 0.000000e+00 : f32
      %12 = vector.broadcast %cst_10 : f32 to vector<16x32xf32>
      %c0_11 = arith.constant 0 : index
      %c0_12 = arith.constant 0 : index
      %13 = vector.load %arg7[%c0_11, %c0_12] : memref<16x32xf32, #tpu.memory_space<vmem>>, vector<16x32xf32>
      tpu.vector_store %arg7[%c0_11, %c0_12], %12 {strides = array<i32>} : memref<16x32xf32, #tpu.memory_space<vmem>>, vector<16x32xf32>,
    } else {
    }
    %c0 = arith.constant 0 : index
    %c0_1 = arith.constant 0 : index
    %3 = vector.load %arg7[%c0, %c0_1] : memref<16x32xf32, #tpu.memory_space<vmem>>, vector<16x32xf32>
    %c0_2 = arith.constant 0 : index
    %c0_3 = arith.constant 0 : index
    %4 = vector.load %arg3[%c0_2, %c0_3] : memref<16x32xf32, #tpu.memory_space<vmem>>, vector<16x32xf32>
    %c0_4 = arith.constant 0 : index
    %c0_5 = arith.constant 0 : index
    %5 = vector.load %arg4[%c0_4, %c0_5] : memref<32x32xf32, #tpu.memory_space<vmem>>, vector<32x32xf32>
    %cst = arith.constant dense<0.000000e+00> : vector<16x32xf32>
    %6 = tpu.matmul %4, %5, %cst {dimension_numbers = #tpu.dot_dimension_numbers<[1], [1], [0], [0], [0, 0, 1, 0], [], []>} : vector<16x32xf32>, vector<32x32xf32>, vector<16x32xf32> -> vector<16x32xf32>
    %7 = arith.addf %3, %6 : vector<16x32xf32>
    %c0_6 = arith.constant 0 : index
    %c0_7 = arith.constant 0 : index
    %8 = vector.load %arg7[%c0_6, %c0_7] : memref<16x32xf32, #tpu.memory_space<vmem>>, vector<16x32xf32>
    tpu.vector_store %arg7[%c0_6, %c0_7], %7 {strides = array<i32>} : memref<16x32xf32, #tpu.memory_space<vmem>>, vector<16x32xf32>,
    %c0_i32_8 = arith.constant 0 : i32
    %9 = arith.cmpi eq, %arg2, %c0_i32_8 : i32
    %10 = arith.extui %9 : i1 to i32
    %c0_i32_9 = arith.constant 0 : i32
    %11 = arith.cmpi ne, %10, %c0_i32_9 : i32
    scf.if %11 {
      %c0_10 = arith.constant 0 : index
      %c0_11 = arith.constant 0 : index
      %12 = vector.load %arg7[%c0_10, %c0_11] : memref<16x32xf32, #tpu.memory_space<vmem>>, vector<16x32xf32>
      %c0_12 = arith.constant 0 : index
      %c0_13 = arith.constant 0 : index
      %13 = vector.load %arg5[%c0_12, %c0_13] : memref<1x32xf32, #tpu.memory_space<vmem>>, vector<1x32xf32>
      %14 = vector.broadcast %13 : vector<1x32xf32> to vector<16x32xf32>
      %15 = arith.addf %12, %14 : vector<16x32xf32>
      %c0_14 = arith.constant 0 : index
      %c0_15 = arith.constant 0 : index
      %16 = vector.load %arg6[%c0_14, %c0_15] : memref<16x32xf32, #tpu.memory_space<vmem>>, vector<16x32xf32>
      tpu.vector_store %arg6[%c0_14, %c0_15], %15 {strides = array<i32>} : memref<16x32xf32, #tpu.memory_space<vmem>>, vector<16x32xf32>,
    } else {
    }
    return
  }
  func.func @transform_0(%arg0: i32, %arg1: i32, %arg2: i32) -> (i32, i32) {
    %c0_i32 = arith.constant 0 : i32
    return %arg0, %arg2 : i32, i32
  }
  func.func @transform_1(%arg0: i32, %arg1: i32, %arg2: i32) -> (i32, i32) {
    %c0_i32 = arith.constant 0 : i32
    return %arg1, %arg2 : i32, i32
  }
  func.func @transform_2(%arg0: i32, %arg1: i32, %arg2: i32) -> (i32, i32) {
    %c0_i32 = arith.constant 0 : i32
    %c0_i32_0 = arith.constant 0 : i32
    return %c0_i32, %arg1 : i32, i32
  }
  func.func @transform_3(%arg0: i32, %arg1: i32, %arg2: i32) -> (i32, i32) {
    %c0_i32 = arith.constant 0 : i32
    return %arg0, %arg1 : i32, i32
  }
}

</mosaic_0001>

<llo_original>
// kernel: attention_forward.3
$region0: #{attention_forward.3}
  #allocation0 [shape = 'u32[]', space=smem, size = 0x4, offset = 0x4, fixed_abs, tag = 'smem constant byte address 0x4 - core index']
  #allocation1 [shape = 'u32[144,128]{1,0:T(1,128)}', space=vmem, size = 0x12000, scoped, tag = 'internal scratch']
  #allocation2 [shape = 'f32[16,96]{1,0:T(8,128)}', space=vmem, size = 0x2000, scoped, tag = 'scratch operand']
  %s0 = inlined_call_operand.vmem [shape: f32[16,32], index: 0, kind: input, shape index: {}]
  %s1 = inlined_call_operand.vmem [shape: f32[96,32], index: 1, kind: input, shape index: {}]
  %s2 = inlined_call_operand.vmem [shape: f32[1,96], index: 2, kind: input, shape index: {}]
  %s3 = inlined_call_operand.vmem [shape: f32[16,96], index: 3, kind: output, shape index: {}]
  %s4 = sld [smem:[#allocation0]]
  $region30: #{attention_forward.3} parent=0
    _
  %s6 = ssub.s32 1, %s4
  %s7 = scalar_select 0, %s6, %s4
  // Predicated region
  $region2: #{attention_forward.3} parent=0 // pred_check
    _
  $region3: #{attention_forward.3} parent=0 // pred_check_branch
    %9 = sbr.rel (0) target = $region5
  $region4: #{attention_forward.3} parent=0 // pred_region
    _
  $region5: #{attention_forward.3} parent=0 // pred_fallthru
    _
  // Predicated region
  $region6: #{attention_forward.3} parent=0 // pred_check
    _
  $region7: #{attention_forward.3} parent=0 // pred_check_branch
    %11 = sbr.rel (0) target = $region9
  $region8: #{attention_forward.3} parent=0 // pred_region
    _
  $region9: #{attention_forward.3} parent=0 // pred_fallthru
    _
  // Predicated region
  $region10: #{attention_forward.3} parent=0 // pred_check
    _
  $region11: #{attention_forward.3} parent=0 // pred_check_branch
    %13 = sbr.rel (0) target = $region13
  $region12: #{attention_forward.3} parent=0 // pred_region
    _
  $region13: #{attention_forward.3} parent=0 // pred_fallthru
    _
  %p14 = scmp.eq.s32.totalorder 0, 0
  // Predicated region
  $region14: #{attention_forward.3} parent=0 // pred_check
    %p15 = pneg %p14
  $region15: #{attention_forward.3} parent=0 // pred_check_branch
    %17 = sbr.rel (%p15) target = $region17
  $region16: #{attention_forward.3} parent=0 // pred_region
    %vm18 = vcmask 785408
    %19 = vst.msk [vmem:[#allocation2] sm:$0xff] %vm18, 0.0
    %20 = vst.msk [vmem:[#allocation2 + $0x8] sm:$0xff] %vm18, 0.0
  $region17: #{attention_forward.3} parent=0 // pred_fallthru
    _
  %v21 = vld [vmem:[#allocation2] sm:$0xff]
  %v22 = vld [vmem:[#allocation2 + $0x8] sm:$0xff]
  %v23 = vld [vmem:[%s0] sm:$0xff]
  %v24 = vld [vmem:[%s0 + $0x8] sm:$0xff]
  %v25 = vld [vmem:[%s1] sm:$0xff]
  %v26 = vld [vmem:[%s1 + $0x8] sm:$0xff]
  %v27 = vld [vmem:[%s1 + $0x10] sm:$0xff]
  %v28 = vld [vmem:[%s1 + $0x18] sm:$0xff]
  %v29 = vld [vmem:[%s1 + $0x20] sm:$0xff]
  %v30 = vld [vmem:[%s1 + $0x28] sm:$0xff]
  %v31 = vld [vmem:[%s1 + $0x30] sm:$0xff]
  %v32 = vld [vmem:[%s1 + $0x38] sm:$0xff]
  %v33 = vld [vmem:[%s1 + $0x40] sm:$0xff]
  %v34 = vld [vmem:[%s1 + $0x48] sm:$0xff]
  %v35 = vld [vmem:[%s1 + $0x50] sm:$0xff]
  %v36 = vld [vmem:[%s1 + $0x58] sm:$0xff]
  %vm37 = vcmask 261120
  %v39 = vsel %vm37, %v23, 0
  %v42 = vsel %vm37, %v24, 0
  %v45 = vsel %vm37, %v25, 0
  %v48 = vsel %vm37, %v26, 0
  %v51 = vsel %vm37, %v27, 0
  %v54 = vsel %vm37, %v28, 0
  %v57 = vsel %vm37, %v29, 0
  %v60 = vsel %vm37, %v30, 0
  %v63 = vsel %vm37, %v31, 0
  %v66 = vsel %vm37, %v32, 0
  %v69 = vsel %vm37, %v33, 0
  %v72 = vsel %vm37, %v34, 0
  %v75 = vsel %vm37, %v35, 0
  %v78 = vsel %vm37, %v36, 0
  %80 = vmatprep.subr.mxu0 0.0
  %81 = vmatpush1.xpose.msra.mxu0 0.0
  %82 = vmatprep.subr.mxu0 0.0
  %83 = vmatpush1.xpose.msra.mxu0 0.0
  %84 = vmatprep.subr.mxu0 0.0
  %85 = vmatpush1.xpose.msra.mxu0 0.0
  %86 = vmatprep.subr.mxu0 0.0
  %87 = vmatpush1.xpose.msra.mxu0 0.0
  %88 = vmatprep.subr.mxu0 0.0
  %89 = vmatpush1.xpose.msra.mxu0 %v78
  %90 = vmatprep.subr.mxu0 0.0
  %91 = vmatpush1.xpose.msra.mxu0 %v75
  %92 = vmatprep.subr.mxu0 0.0
  %93 = vmatpush1.xpose.msra.mxu0 %v72
  %94 = vmatprep.subr.mxu0 0.0
  %95 = vmatpush1.xpose.msra.mxu0 %v69
  %96 = vmatprep.subr.mxu0 0.0
  %97 = vmatpush1.xpose.msra.mxu0 %v66
  %98 = vmatprep.subr.mxu0 0.0
  %99 = vmatpush1.xpose.msra.mxu0 %v63
  %100 = vmatprep.subr.mxu0 0.0
  %101 = vmatpush1.xpose.msra.mxu0 %v60
  %102 = vmatprep.subr.mxu0 0.0
  %103 = vmatpush1.xpose.msra.mxu0 %v57
  %104 = vmatprep.subr.mxu0 0.0
  %105 = vmatpush1.xpose.msra.mxu0 %v54
  %106 = vmatprep.subr.mxu0 0.0
  %107 = vmatpush1.xpose.msra.mxu0 %v51
  %108 = vmatprep.subr.mxu0 0.0
  %109 = vmatpush1.xpose.msra.mxu0 %v48
  %110 = vmatprep.subr.mxu0 0.0
  %111 = vmatpush1.xpose.msra.mxu0 %v45
  %112 = vmatprep.subr.mxu0 0.0
  %113 = vmatpush2.xpose.msra.mxu0 0.0
  %114 = vmatprep.subr.mxu0 0.0
  %115 = vmatpush2.xpose.msra.mxu0 0.0
  %116 = vmatprep.subr.mxu0 0.0
  %117 = vmatpush2.xpose.msra.mxu0 0.0
  %118 = vmatprep.subr.mxu0 0.0
  %119 = vmatpush2.xpose.msra.mxu0 0.0
  %120 = vmatprep.subr.mxu0 0.0
  %121 = vmatpush2.xpose.msra.mxu0 0.0
  %122 = vmatprep.subr.mxu0 0.0
  %123 = vmatpush2.xpose.msra.mxu0 0.0
  %124 = vmatprep.subr.mxu0 0.0
  %125 = vmatpush2.xpose.msra.mxu0 0.0
  %126 = vmatprep.subr.mxu0 0.0
  %127 = vmatpush2.xpose.msra.mxu0 0.0
  %128 = vmatprep.subr.mxu0 0.0
  %129 = vmatpush2.xpose.msra.mxu0 0.0
  %130 = vmatprep.subr.mxu0 0.0
  %131 = vmatpush2.xpose.msra.mxu0 0.0
  %132 = vmatprep.subr.mxu0 0.0
  %133 = vmatpush2.xpose.msra.mxu0 0.0
  %134 = vmatprep.subr.mxu0 0.0
  %135 = vmatpush2.xpose.msra.mxu0 0.0
  %136 = vmatprep.subr.mxu0 0.0
  %137 = vmatpush2.xpose.msra.mxu0 0.0
  %138 = vmatprep.subr.mxu0 0.0
  %139 = vmatpush2.xpose.msra.mxu0 0.0
  %140 = vmatprep.subr.mxu0 0.0
  %141 = vmatpush2.xpose.msra.mxu0 0.0
  %142 = vmatprep.subr.mxu0 0.0
  %143 = vmatpush2.xpose.msra.mxu0 0.0
  %144 = vmatprep.mubr.f32.mxu0 0.0
  %145 = vmatmul.mubr.f32.gmra.mxu0 %v39
  %v146 = vpop.f32.mrf.mxu0
  %v147 = vadd.f32 0.0, %v146
  %v148 = vpop.f32.mrf.mxu0
  %149 = vmatprep.mubr.f32.mxu0 0.0
  %150 = vmatmul.mubr.f32.gmra.mxu0 %v42
  %v151 = vpop.f32.mrf.mxu0
  %v152 = vadd.f32 0.0, %v151
  %v153 = vpop.f32.mrf.mxu0
  %154 = vdwg.mxu0
  %v155 = vadd.f32 %v21, %v147
  %v156 = vadd.f32 %v22, %v152
  %vm157 = vcmask 785408
  %158 = vst.msk [vmem:[#allocation2] sm:$0xff] %vm157, %v155
  %159 = vst.msk [vmem:[#allocation2 + $0x8] sm:$0xff] %vm157, %v156
  // Predicated region
  $region18: #{attention_forward.3} parent=0 // pred_check
    %p160 = pneg %p14
  $region19: #{attention_forward.3} parent=0 // pred_check_branch
    %162 = sbr.rel (%p160) target = $region21
  $region20: #{attention_forward.3} parent=0 // pred_region
    %v163 = vld [vmem:[#allocation2] sm:$0xff]
    %v164 = vld [vmem:[#allocation2 + $0x8] sm:$0xff]
    %v165 = vld [vmem:[%s2] sm:$0x1]
    %v167 = vlaneseq
    %v168 = vshrl.u32 %v167, 7
    %v169 = vsub.s32 0, %v168
    %v170 = vrot.slane %v165, %v169
    %v172 = vadd.f32 %v163, %v170
    %v173 = vadd.f32 %v164, %v170
    %174 = vst.msk [vmem:[%s3] sm:$0xff] %vm157, %v172
    %175 = vst.msk [vmem:[%s3 + $0x8] sm:$0xff] %vm157, %v173
  $region21: #{attention_forward.3} parent=0 // pred_fallthru
    _
  // Predicated region
  $region22: #{attention_forward.3} parent=0 // pred_check
    _
  $region23: #{attention_forward.3} parent=0 // pred_check_branch
    %177 = sbr.rel (0) target = $region25
  $region24: #{attention_forward.3} parent=0 // pred_region
    _
  $region25: #{attention_forward.3} parent=0 // pred_fallthru
    _
  // Predicated region
  $region26: #{attention_forward.3} parent=0 // pred_check
    _
  $region27: #{attention_forward.3} parent=0 // pred_check_branch
    %179 = sbr.rel (0) target = $region29
  $region28: #{attention_forward.3} parent=0 // pred_region
    _
  $region29: #{attention_forward.3} parent=0 // pred_fallthru
    _

// kernel: attention_forward.5
$region0: #{attention_forward.5}
  #allocation0 [shape = 'u32[]', space=smem, size = 0x4, offset = 0x4, fixed_abs, tag = 'smem constant byte address 0x4 - core index']
  #allocation1 [shape = 'u32[144,128]{1,0:T(1,128)}', space=vmem, size = 0x12000, scoped, tag = 'internal scratch']
  #allocation2 [shape = 'f32[16,32]{1,0:T(8,128)}', space=vmem, size = 0x2000, scoped, tag = 'scratch operand']
  %s0 = inlined_call_operand.vmem [shape: f32[16,32], index: 0, kind: input, shape index: {}]
  %s1 = inlined_call_operand.vmem [shape: f32[32,32], index: 1, kind: input, shape index: {}]
  %s2 = inlined_call_operand.vmem [shape: f32[1,32], index: 2, kind: input, shape index: {}]
  %s3 = inlined_call_operand.hbm [shape: f32[16,32], index: 3, kind: output, shape index: {}]
  %s4 = sld [smem:[#allocation0]]
  $region30: #{attention_forward.5} parent=0
    _
  %s6 = ssub.s32 1, %s4
  %s7 = scalar_select 0, %s6, %s4
  $region1: #{attention_forward.5} parent=0
    #allocation3 [shape = 'u8[8192]{0}', space=vmem, size = 0x2000, scoped, tag = 'output window, operand 0, single buffered']
    #allocation4 [shape = 's32[1]{0}', space=sflag, size = 0x4, scoped, tag = 'scoped memory for attention_forward.5']
    %8 = vsyncpa [#allocation4], 0
    // Predicated region
    $region2: #{attention_forward.5} parent=1 // pred_check
      _
    $region3: #{attention_forward.5} parent=1 // pred_check_branch
      %10 = sbr.rel (0) target = $region5
    $region4: #{attention_forward.5} parent=1 // pred_region
      _
    $region5: #{attention_forward.5} parent=1 // pred_fallthru
      _
    // Predicated region
    $region6: #{attention_forward.5} parent=1 // pred_check
      _
    $region7: #{attention_forward.5} parent=1 // pred_check_branch
      %12 = sbr.rel (0) target = $region9
    $region8: #{attention_forward.5} parent=1 // pred_region
      _
    $region9: #{attention_forward.5} parent=1 // pred_fallthru
      _
    // Predicated region
    $region10: #{attention_forward.5} parent=1 // pred_check
      _
    $region11: #{attention_forward.5} parent=1 // pred_check_branch
      %14 = sbr.rel (0) target = $region13
    $region12: #{attention_forward.5} parent=1 // pred_region
      _
    $region13: #{attention_forward.5} parent=1 // pred_fallthru
      _
    %p15 = scmp.eq.s32.totalorder 0, 0
    // Predicated region
    $region14: #{attention_forward.5} parent=1 // pred_check
      %p16 = pneg %p15
    $region15: #{attention_forward.5} parent=1 // pred_check_branch
      %18 = sbr.rel (%p16) target = $region17
    $region16: #{attention_forward.5} parent=1 // pred_region
      %vm19 = vcmask 261120
      %20 = vst.msk [vmem:[#allocation2] sm:$0xff] %vm19, 0.0
      %21 = vst.msk [vmem:[#allocation2 + $0x8] sm:$0xff] %vm19, 0.0
    $region17: #{attention_forward.5} parent=1 // pred_fallthru
      _
    %v22 = vld [vmem:[#allocation2] sm:$0xff]
    %v23 = vld [vmem:[#allocation2 + $0x8] sm:$0xff]
    %v24 = vld [vmem:[%s0] sm:$0xff]
    %v25 = vld [vmem:[%s0 + $0x8] sm:$0xff]
    %v26 = vld [vmem:[%s1] sm:$0xff]
    %v27 = vld [vmem:[%s1 + $0x8] sm:$0xff]
    %v28 = vld [vmem:[%s1 + $0x10] sm:$0xff]
    %v29 = vld [vmem:[%s1 + $0x18] sm:$0xff]
    %vm30 = vcmask 261120
    %v32 = vsel %vm30, %v24, 0
    %v35 = vsel %vm30, %v25, 0
    %v38 = vsel %vm30, %v26, 0
    %v41 = vsel %vm30, %v27, 0
    %v44 = vsel %vm30, %v28, 0
    %v47 = vsel %vm30, %v29, 0
    %49 = vmatprep.subr.mxu0 0.0
    %50 = vmatpush1.xpose.msra.mxu0 0.0
    %51 = vmatprep.subr.mxu0 0.0
    %52 = vmatpush1.xpose.msra.mxu0 0.0
    %53 = vmatprep.subr.mxu0 0.0
    %54 = vmatpush1.xpose.msra.mxu0 0.0
    %55 = vmatprep.subr.mxu0 0.0
    %56 = vmatpush1.xpose.msra.mxu0 0.0
    %57 = vmatprep.subr.mxu0 0.0
    %58 = vmatpush1.xpose.msra.mxu0 0.0
    %59 = vmatprep.subr.mxu0 0.0
    %60 = vmatpush1.xpose.msra.mxu0 0.0
    %61 = vmatprep.subr.mxu0 0.0
    %62 = vmatpush1.xpose.msra.mxu0 0.0
    %63 = vmatprep.subr.mxu0 0.0
    %64 = vmatpush1.xpose.msra.mxu0 0.0
    %65 = vmatprep.subr.mxu0 0.0
    %66 = vmatpush1.xpose.msra.mxu0 0.0
    %67 = vmatprep.subr.mxu0 0.0
    %68 = vmatpush1.xpose.msra.mxu0 0.0
    %69 = vmatprep.subr.mxu0 0.0
    %70 = vmatpush1.xpose.msra.mxu0 0.0
    %71 = vmatprep.subr.mxu0 0.0
    %72 = vmatpush1.xpose.msra.mxu0 0.0
    %73 = vmatprep.subr.mxu0 0.0
    %74 = vmatpush1.xpose.msra.mxu0 %v47
    %75 = vmatprep.subr.mxu0 0.0
    %76 = vmatpush1.xpose.msra.mxu0 %v44
    %77 = vmatprep.subr.mxu0 0.0
    %78 = vmatpush1.xpose.msra.mxu0 %v41
    %79 = vmatprep.subr.mxu0 0.0
    %80 = vmatpush1.xpose.msra.mxu0 %v38
    %81 = vmatprep.subr.mxu0 0.0
    %82 = vmatpush2.xpose.msra.mxu0 0.0
    %83 = vmatprep.subr.mxu0 0.0
    %84 = vmatpush2.xpose.msra.mxu0 0.0
    %85 = vmatprep.subr.mxu0 0.0
    %86 = vmatpush2.xpose.msra.mxu0 0.0
    %87 = vmatprep.subr.mxu0 0.0
    %88 = vmatpush2.xpose.msra.mxu0 0.0
    %89 = vmatprep.subr.mxu0 0.0
    %90 = vmatpush2.xpose.msra.mxu0 0.0
    %91 = vmatprep.subr.mxu0 0.0
    %92 = vmatpush2.xpose.msra.mxu0 0.0
    %93 = vmatprep.subr.mxu0 0.0
    %94 = vmatpush2.xpose.msra.mxu0 0.0
    %95 = vmatprep.subr.mxu0 0.0
    %96 = vmatpush2.xpose.msra.mxu0 0.0
    %97 = vmatprep.subr.mxu0 0.0
    %98 = vmatpush2.xpose.msra.mxu0 0.0
    %99 = vmatprep.subr.mxu0 0.0
    %100 = vmatpush2.xpose.msra.mxu0 0.0
    %101 = vmatprep.subr.mxu0 0.0
    %102 = vmatpush2.xpose.msra.mxu0 0.0
    %103 = vmatprep.subr.mxu0 0.0
    %104 = vmatpush2.xpose.msra.mxu0 0.0
    %105 = vmatprep.subr.mxu0 0.0
    %106 = vmatpush2.xpose.msra.mxu0 0.0
    %107 = vmatprep.subr.mxu0 0.0
    %108 = vmatpush2.xpose.msra.mxu0 0.0
    %109 = vmatprep.subr.mxu0 0.0
    %110 = vmatpush2.xpose.msra.mxu0 0.0
    %111 = vmatprep.subr.mxu0 0.0
    %112 = vmatpush2.xpose.msra.mxu0 0.0
    %113 = vmatprep.mubr.f32.mxu0 0.0
    %114 = vmatmul.mubr.f32.gmra.mxu0 %v32
    %v115 = vpop.f32.mrf.mxu0
    %v116 = vadd.f32 0.0, %v115
    %v117 = vpop.f32.mrf.mxu0
    %118 = vmatprep.mubr.f32.mxu0 0.0
    %119 = vmatmul.mubr.f32.gmra.mxu0 %v35
    %v120 = vpop.f32.mrf.mxu0
    %v121 = vadd.f32 0.0, %v120
    %v122 = vpop.f32.mrf.mxu0
    %123 = vdwg.mxu0
    %v124 = vadd.f32 %v22, %v116
    %v125 = vadd.f32 %v23, %v121
    %126 = vst.msk [vmem:[#allocation2] sm:$0xff] %vm30, %v124
    %127 = vst.msk [vmem:[#allocation2 + $0x8] sm:$0xff] %vm30, %v125
    // Predicated region
    $region18: #{attention_forward.5} parent=1 // pred_check
      %p128 = pneg %p15
    $region19: #{attention_forward.5} parent=1 // pred_check_branch
      %130 = sbr.rel (%p128) target = $region21
    $region20: #{attention_forward.5} parent=1 // pred_region
      %v131 = vld [vmem:[#allocation2] sm:$0xff]
      %v132 = vld [vmem:[#allocation2 + $0x8] sm:$0xff]
      %v133 = vld [vmem:[%s2] sm:$0x1]
      %v135 = vlaneseq
      %v136 = vshrl.u32 %v135, 7
      %v137 = vsub.s32 0, %v136
      %v138 = vrot.slane %v133, %v137
      %v140 = vadd.f32 %v131, %v138
      %v141 = vadd.f32 %v132, %v138
      %142 = vst.msk [vmem:[#allocation3] sm:$0xff] %vm30, %v140
      %143 = vst.msk [vmem:[#allocation3 + $0x8] sm:$0xff] %vm30, %v141
    $region21: #{attention_forward.5} parent=1 // pred_fallthru
      _
    // Predicated region
    $region22: #{attention_forward.5} parent=1 // pred_check
      _
    $region23: #{attention_forward.5} parent=1 // pred_check_branch
      %145 = sbr.rel (0) target = $region25
    $region24: #{attention_forward.5} parent=1 // pred_region
      %s147 = ssub.s32 256, 256
      %148 = vsyncadd [#allocation4], %s147
      %s149 = sshll.u32 [#allocation3], 4
      %s150 = int_to_ptr.vmem [resolvable:$true] %s149
      %155 = dma.vmem_to_hbm [thread:$0]  %s150, 256, %s3, [#allocation4], 128, 128, 8
    $region25: #{attention_forward.5} parent=1 // pred_fallthru
      _
    // Predicated region
    $region26: #{attention_forward.5} parent=1 // pred_check
      _
    $region27: #{attention_forward.5} parent=1 // pred_check_branch
      %157 = sbr.rel (0) target = $region29
    $region28: #{attention_forward.5} parent=1 // pred_region
      %158 = dma.done [#allocation4], 256
    $region29: #{attention_forward.5} parent=1 // pred_fallthru
      _
    %159 = vsyncpa [#allocation4], 1

// kernel: attention_forward.4
$region0: #{attention_forward.4}
  #allocation0 [shape = 'u32[]', space=smem, size = 0x4, offset = 0x4, fixed_abs, tag = 'smem constant byte address 0x4 - core index']
  #allocation1 [shape = 'u32[144,128]{1,0:T(1,128)}', space=vmem, size = 0x12000, scoped, tag = 'internal scratch']
  %s0 = inlined_call_operand.vmem [shape: f32[8,8,8], index: 0, kind: input, shape index: {}]
  %s1 = inlined_call_operand.vmem [shape: f32[8,8,8], index: 1, kind: input, shape index: {}]
  %s2 = inlined_call_operand.vmem [shape: f32[8,8,8], index: 2, kind: input, shape index: {}]
  %s3 = inlined_call_operand.hbm [shape: f32[8,8,8], index: 3, kind: output, shape index: {0}]
  %s4 = inlined_call_operand.vmem [shape: f32[8,8,8], index: 4, kind: output, shape index: {1}]
  %5 = xla_tuple %s3, %s4
  %s6 = sld [smem:[#allocation0]]
  $region53: #{attention_forward.4} parent=0
    _
  %s8 = ssub.s32 1, %s6
  %s9 = scalar_select 0, %s8, %s6
  $region1: #{attention_forward.4} parent=0
    #allocation2 [shape = 'u8[8192]{0}', space=vmem, size = 0x2000, scoped, tag = 'output window, operand 0']
    #allocation3 [shape = 's32[2]{0}', space=sflag, size = 0x8, scoped, tag = 'scoped memory for attention_forward.4']
    %10 = vsyncpa [#allocation3], 0
    %s11 = scalar_lea.sflag [#allocation3], 1
    %12 = vsyncpa %s11, 0
    loop: start=0, step=1, limit=10
    $region2: #{attention_forward.4} parent=1 // loop_pre_header
      _
    $region3: #{attention_forward.4} parent=1 // loop_header
      %s14 = sphi 0, %s18
      %p15 = scmp.ge.s32.totalorder %s14, 10
      %s21 = sphi 0, %s33
      %s22 = sphi 0, %s29
      %s23 = sphi 0, %s21
      %s24 = sphi 0, %s22
      %s25 = sphi 0, %s23
      %s26 = sphi 0, %s24
      %s38 = sphi 0, %s40
      %s41 = sphi 0, %s38
      %s42 = sphi 0, %s41
      %s58 = sphi 0, %s42
      %s64 = sphi 0, %s66
      %s67 = sphi 0, %s64
      %s68 = sphi 0, %s67
      %s84 = sphi 0, %s68
      %s90 = sphi 0, %s92
      %s93 = sphi 0, %s90
      %s94 = sphi 0, %s93
      %s110 = sphi 0, %s94
      %s118 = sphi 0, %s120
      %s121 = sphi 0, %s118
      %s122 = sphi 0, %s121
      %s138 = sphi 0, %s122
      %s146 = sphi 0, %s148
      %s149 = sphi 0, %s146
      %s150 = sphi 0, %s149
      %s166 = sphi 0, %s150
    $region4: #{attention_forward.4} parent=1 // loop_header_branch
      %17 = sbr.rel (%p15) target = $region8
    $region5: #{attention_forward.4} parent=1 // loop_body
      %s19 = ssub.s32 %s14, 1
      %s20 = ssub.s32 %s14, 2
      %s27 = sadd.s32 1, %s22
      %p28 = scmp.ge.s32.totalorder %s27, 1
      %s29 = scalar_select %p28, 0, %s27
      %s30 = sadd.s32 1, %s21
      %s31 = scalar_select %p28, %s30, %s21
      %p32 = scmp.ge.s32.totalorder %s31, 8
      %s33 = scalar_select %p32, 0, %s31
      %s34 = ssub.s32 %s21, %s33
      %s35 = ssub.s32 %s22, %s29
      %s36 = sor.u32 %s34, %s35
      %p37 = scmp.eq.s32.totalorder %s36, 0
      %s39 = sadd.s32 %s38, 1
      %s40 = scalar_select %p37, %s38, %s39
      %p43 = pneg %p37
      %p44 = scmp.eq.s32.totalorder %s14, 7
      %p45 = por %p43, %p44
      %p46 = scmp.ne.s32.totalorder %s38, %s41
      %p47 = scmp.eq.s32.totalorder %s14, 0
      %p48 = por %p46, %p47
      %p49 = scmp.ne.s32.totalorder %s38, %s41
      %p50 = scmp.eq.s32.totalorder %s19, 7
      %p51 = por %p49, %p50
      %p52 = scmp.ne.s32.totalorder %s41, %s42
      %p53 = scmp.eq.s32.totalorder %s19, 0
      %p54 = por %p52, %p53
      %p55 = scmp.ne.s32.totalorder %s41, %s42
      %p56 = scmp.eq.s32.totalorder %s20, 7
      %p57 = por %p55, %p56
      %p59 = scmp.ne.s32.totalorder %s42, %s58
      %p60 = scmp.eq.s32.totalorder %s20, 0
      %p61 = por %p59, %p60
      %s62 = ssub.s32 %s21, %s33
      %p63 = scmp.eq.s32.totalorder %s62, 0
      %s65 = sadd.s32 %s64, 1
      %s66 = scalar_select %p63, %s64, %s65
      %p69 = pneg %p63
      %p70 = scmp.eq.s32.totalorder %s14, 7
      %p71 = por %p69, %p70
      %p72 = scmp.ne.s32.totalorder %s64, %s67
      %p73 = scmp.eq.s32.totalorder %s14, 0
      %p74 = por %p72, %p73
      %p75 = scmp.ne.s32.totalorder %s64, %s67
      %p76 = scmp.eq.s32.totalorder %s19, 7
      %p77 = por %p75, %p76
      %p78 = scmp.ne.s32.totalorder %s67, %s68
      %p79 = scmp.eq.s32.totalorder %s19, 0
      %p80 = por %p78, %p79
      %p81 = scmp.ne.s32.totalorder %s67, %s68
      %p82 = scmp.eq.s32.totalorder %s20, 7
      %p83 = por %p81, %p82
      %p85 = scmp.ne.s32.totalorder %s68, %s84
      %p86 = scmp.eq.s32.totalorder %s20, 0
      %p87 = por %p85, %p86
      %s88 = ssub.s32 %s21, %s33
      %p89 = scmp.eq.s32.totalorder %s88, 0
      %s91 = sadd.s32 %s90, 1
      %s92 = scalar_select %p89, %s90, %s91
      %p95 = pneg %p89
      %p96 = scmp.eq.s32.totalorder %s14, 7
      %p97 = por %p95, %p96
      %p98 = scmp.ne.s32.totalorder %s90, %s93
      %p99 = scmp.eq.s32.totalorder %s14, 0
      %p100 = por %p98, %p99
      %p101 = scmp.ne.s32.totalorder %s90, %s93
      %p102 = scmp.eq.s32.totalorder %s19, 7
      %p103 = por %p101, %p102
      %p104 = scmp.ne.s32.totalorder %s93, %s94
      %p105 = scmp.eq.s32.totalorder %s19, 0
      %p106 = por %p104, %p105
      %p107 = scmp.ne.s32.totalorder %s93, %s94
      %p108 = scmp.eq.s32.totalorder %s20, 7
      %p109 = por %p107, %p108
      %p111 = scmp.ne.s32.totalorder %s94, %s110
      %p112 = scmp.eq.s32.totalorder %s20, 0
      %p113 = por %p111, %p112
      %s114 = ssub.s32 %s21, %s33
      %s115 = ssub.s32 %s22, %s29
      %s116 = sor.u32 %s114, %s115
      %p117 = scmp.eq.s32.totalorder %s116, 0
      %s119 = sadd.s32 %s118, 1
      %s120 = scalar_select %p117, %s118, %s119
      %p123 = pneg %p117
      %p124 = scmp.eq.s32.totalorder %s14, 7
      %p125 = por %p123, %p124
      %p126 = scmp.ne.s32.totalorder %s118, %s121
      %p127 = scmp.eq.s32.totalorder %s14, 0
      %p128 = por %p126, %p127
      %p129 = scmp.ne.s32.totalorder %s118, %s121
      %p130 = scmp.eq.s32.totalorder %s19, 7
      %p131 = por %p129, %p130
      %p132 = scmp.ne.s32.totalorder %s121, %s122
      %p133 = scmp.eq.s32.totalorder %s19, 0
      %p134 = por %p132, %p133
      %p135 = scmp.ne.s32.totalorder %s121, %s122
      %p136 = scmp.eq.s32.totalorder %s20, 7
      %p137 = por %p135, %p136
      %p139 = scmp.ne.s32.totalorder %s122, %s138
      %p140 = scmp.eq.s32.totalorder %s20, 0
      %p141 = por %p139, %p140
      %s142 = ssub.s32 %s21, %s33
      %s143 = ssub.s32 %s22, %s29
      %s144 = sor.u32 %s142, %s143
      %p145 = scmp.eq.s32.totalorder %s144, 0
      %s147 = sadd.s32 %s146, 1
      %s148 = scalar_select %p145, %s146, %s147
      %p151 = pneg %p145
      %p152 = scmp.eq.s32.totalorder %s14, 7
      %p153 = por %p151, %p152
      %p154 = scmp.ne.s32.totalorder %s146, %s149
      %p155 = scmp.eq.s32.totalorder %s14, 0
      %p156 = por %p154, %p155
      %p157 = scmp.ne.s32.totalorder %s146, %s149
      %p158 = scmp.eq.s32.totalorder %s19, 7
      %p159 = por %p157, %p158
      %p160 = scmp.ne.s32.totalorder %s149, %s150
      %p161 = scmp.eq.s32.totalorder %s19, 0
      %p162 = por %p160, %p161
      %p163 = scmp.ne.s32.totalorder %s149, %s150
      %p164 = scmp.eq.s32.totalorder %s20, 7
      %p165 = por %p163, %p164
      %p167 = scmp.ne.s32.totalorder %s150, %s166
      %p168 = scmp.eq.s32.totalorder %s20, 0
      %p169 = por %p167, %p168
      %p170 = scmp.le.s32.totalorder 1, %s14
      %p171 = scmp.lt.s32.totalorder %s14, 9
      %p172 = pnand %p170, %p171
      %p173 = pneg %p172
      // Predicated region
      $region9: #{attention_forward.4} parent=5 // pred_check
        _
      $region10: #{attention_forward.4} parent=5 // pred_check_branch
        %175 = sbr.rel (%p172) target = $region12
      $region11: #{attention_forward.4} parent=5 // pred_region
        %s176 = ssub.s32 %s14, 1
      $region12: #{attention_forward.4} parent=5 // pred_fallthru
        _
      %p177 = scmp.lt.s32.totalorder %s14, 8
      // Predicated region
      $region13: #{attention_forward.4} parent=5 // pred_check
        %p178 = pneg %p177
      $region14: #{attention_forward.4} parent=5 // pred_check_branch
        %180 = sbr.rel (%p178) target = $region16
      $region15: #{attention_forward.4} parent=5 // pred_region
        // Predicated region
        $region17: #{attention_forward.4} parent=15 // pred_check
          %p181 = pneg %p48
        $region18: #{attention_forward.4} parent=15 // pred_check_branch
          %183 = sbr.rel (%p181) target = $region20
        $region19: #{attention_forward.4} parent=15 // pred_region
          %p184 = scmp.lt.s32.totalorder %s21, 7
          %s185 = scalar_select %p184, %s21, 7
          %p186 = scmp.lt.s32.totalorder %s22, 0
          %s187 = scalar_select %p186, %s22, 0
          %s188 = sadd.s32 %s187, %s185
          %s189 = smul.addr %s188, 8
          %s190 = scalar_lea.vmem %s0, %s189
        $region20: #{attention_forward.4} parent=15 // pred_fallthru
          _
        // Predicated region
        $region21: #{attention_forward.4} parent=15 // pred_check
          %p191 = pneg %p74
        $region22: #{attention_forward.4} parent=15 // pred_check_branch
          %193 = sbr.rel (%p191) target = $region24
        $region23: #{attention_forward.4} parent=15 // pred_region
          %p194 = scmp.lt.s32.totalorder %s21, 7
          %s195 = scalar_select %p194, %s21, 7
          %s196 = smul.addr %s195, 8
          %s197 = scalar_lea.vmem %s1, %s196
        $region24: #{attention_forward.4} parent=15 // pred_fallthru
          _
        // Predicated region
        $region25: #{attention_forward.4} parent=15 // pred_check
          %p198 = pneg %p100
        $region26: #{attention_forward.4} parent=15 // pred_check_branch
          %200 = sbr.rel (%p198) target = $region28
        $region27: #{attention_forward.4} parent=15 // pred_region
          %p201 = scmp.lt.s32.totalorder %s21, 7
          %s202 = scalar_select %p201, %s21, 7
          %s203 = smul.addr %s202, 8
          %s204 = scalar_lea.vmem %s2, %s203
        $region28: #{attention_forward.4} parent=15 // pred_fallthru
          _
      $region16: #{attention_forward.4} parent=5 // pred_fallthru
        _
      %p205 = scmp.le.s32.totalorder 1, %s14
      %p206 = scmp.lt.s32.totalorder %s14, 9
      %p207 = pnand %p205, %p206
      %p208 = pneg %p207
      // Predicated region
      $region29: #{attention_forward.4} parent=5 // pred_check
        _
      $region30: #{attention_forward.4} parent=5 // pred_check_branch
        %210 = sbr.rel (%p207) target = $region32
      $region31: #{attention_forward.4} parent=5 // pred_region
        %s211 = ssub.s32 %s14, 1
        %p212 = scmp.lt.s32.totalorder %s23, 7
        %s213 = scalar_select %p212, %s23, 7
        %p214 = scmp.lt.s32.totalorder %s24, 0
        %s215 = scalar_select %p214, %s24, 0
        %s216 = sadd.s32 %s215, %s213
        %s217 = smul.addr %s216, 8
        %s218 = scalar_lea.vmem %s0, %s217
        %p219 = pneg %p54
        %p220 = pneg %p51
        %p221 = scmp.lt.s32.totalorder %s23, 7
        %s222 = scalar_select %p221, %s23, 7
        %s223 = smul.addr %s222, 8
        %s224 = scalar_lea.vmem %s1, %s223
        %p225 = pneg %p80
        %p226 = pneg %p77
        %p227 = scmp.lt.s32.totalorder %s23, 7
        %s228 = scalar_select %p227, %s23, 7
        %s229 = smul.addr %s228, 8
        %s230 = scalar_lea.vmem %s2, %s229
        %p231 = pneg %p106
        %p232 = pneg %p103
        %p233 = pneg %p134
        %p234 = pneg %p131
        %s235 = sand.u32 %s121, 1
        %s236 = scalar_lea.sflag [#allocation3], %s235
        %s237 = sand.u32 %s121, 1
        %s238 = smul.addr %s237, 8
        %s239 = scalar_lea.vmem [#allocation2], %s238
        %p240 = pneg %p162
        %p241 = pneg %p159
        %p242 = scmp.lt.s32.totalorder %s23, 7
        %s243 = scalar_select %p242, %s23, 7
        %p244 = scmp.lt.s32.totalorder %s24, 0
        %s245 = scalar_select %p244, %s24, 0
        %s246 = sadd.s32 %s245, %s243
        %s247 = smul.addr %s246, 8
        %s248 = scalar_lea.vmem %s4, %s247
        %p249 = scmp.lt.s32.totalorder %s23, 7
        %s250 = scalar_select %p249, %s23, 7
        %p251 = scmp.lt.s32.totalorder %s24, 0
        %s252 = scalar_select %p251, %s24, 0
        %s253 = sadd.s32 %s252, %s250
        %s254 = smul.addr %s253, 8
        %s255 = scalar_lea.vmem %s0, %s254
        %p256 = scmp.lt.s32.totalorder %s23, 7
        %s257 = scalar_select %p256, %s23, 7
        %s258 = smul.addr %s257, 8
        %s259 = scalar_lea.vmem %s1, %s258
        %p260 = scmp.lt.s32.totalorder %s23, 7
        %s261 = scalar_select %p260, %s23, 7
        %s262 = smul.addr %s261, 8
        %s263 = scalar_lea.vmem %s2, %s262
        %p264 = scmp.lt.s32.totalorder %s23, 7
        %s265 = scalar_select %p264, %s23, 7
        %p266 = scmp.lt.s32.totalorder %s24, 0
        %s267 = scalar_select %p266, %s24, 0
        %s268 = sadd.s32 %s267, %s265
        %s269 = smul.addr %s268, 8
        %s270 = scalar_lea.vmem %s4, %s269
        %v271 = vld [vmem:[%s255] sm:$0xff]
        %v272 = vld [vmem:[%s259] sm:$0xff]
        %v273 = vld [vmem:[%s263] sm:$0xff]
        %v274 = vmul.f32 %v271, 0.35355338
        %vm275 = vcmask 64512
        %v277 = vsel %vm275, %v274, 0
        %v280 = vsel %vm275, %v272, 0
        %282 = vmatprep.subr.mxu0 0.0
        %283 = vmatpush1.xpose.msra.mxu0 0.0
        %284 = vmatprep.subr.mxu0 0.0
        %285 = vmatpush1.xpose.msra.mxu0 0.0
        %286 = vmatprep.subr.mxu0 0.0
        %287 = vmatpush1.xpose.msra.mxu0 0.0
        %288 = vmatprep.subr.mxu0 0.0
        %289 = vmatpush1.xpose.msra.mxu0 0.0
        %290 = vmatprep.subr.mxu0 0.0
        %291 = vmatpush1.xpose.msra.mxu0 0.0
        %292 = vmatprep.subr.mxu0 0.0
        %293 = vmatpush1.xpose.msra.mxu0 0.0
        %294 = vmatprep.subr.mxu0 0.0
        %295 = vmatpush1.xpose.msra.mxu0 0.0
        %296 = vmatprep.subr.mxu0 0.0
        %297 = vmatpush1.xpose.msra.mxu0 0.0
        %298 = vmatprep.subr.mxu0 0.0
        %299 = vmatpush1.xpose.msra.mxu0 0.0
        %300 = vmatprep.subr.mxu0 0.0
        %301 = vmatpush1.xpose.msra.mxu0 0.0
        %302 = vmatprep.subr.mxu0 0.0
        %303 = vmatpush1.xpose.msra.mxu0 0.0
        %304 = vmatprep.subr.mxu0 0.0
        %305 = vmatpush1.xpose.msra.mxu0 0.0
        %306 = vmatprep.subr.mxu0 0.0
        %307 = vmatpush1.xpose.msra.mxu0 0.0
        %308 = vmatprep.subr.mxu0 0.0
        %309 = vmatpush1.xpose.msra.mxu0 0.0
        %310 = vmatprep.subr.mxu0 0.0
        %311 = vmatpush1.xpose.msra.mxu0 0.0
        %312 = vmatprep.subr.mxu0 0.0
        %313 = vmatpush1.xpose.msra.mxu0 %v280
        %314 = vmatprep.subr.mxu0 0.0
        %315 = vmatpush2.xpose.msra.mxu0 0.0
        %316 = vmatprep.subr.mxu0 0.0
        %317 = vmatpush2.xpose.msra.mxu0 0.0
        %318 = vmatprep.subr.mxu0 0.0
        %319 = vmatpush2.xpose.msra.mxu0 0.0
        %320 = vmatprep.subr.mxu0 0.0
        %321 = vmatpush2.xpose.msra.mxu0 0.0
        %322 = vmatprep.subr.mxu0 0.0
        %323 = vmatpush2.xpose.msra.mxu0 0.0
        %324 = vmatprep.subr.mxu0 0.0
        %325 = vmatpush2.xpose.msra.mxu0 0.0
        %326 = vmatprep.subr.mxu0 0.0
        %327 = vmatpush2.xpose.msra.mxu0 0.0
        %328 = vmatprep.subr.mxu0 0.0
        %329 = vmatpush2.xpose.msra.mxu0 0.0
        %330 = vmatprep.subr.mxu0 0.0
        %331 = vmatpush2.xpose.msra.mxu0 0.0
        %332 = vmatprep.subr.mxu0 0.0
        %333 = vmatpush2.xpose.msra.mxu0 0.0
        %334 = vmatprep.subr.mxu0 0.0
        %335 = vmatpush2.xpose.msra.mxu0 0.0
        %336 = vmatprep.subr.mxu0 0.0
        %337 = vmatpush2.xpose.msra.mxu0 0.0
        %338 = vmatprep.subr.mxu0 0.0
        %339 = vmatpush2.xpose.msra.mxu0 0.0
        %340 = vmatprep.subr.mxu0 0.0
        %341 = vmatpush2.xpose.msra.mxu0 0.0
        %342 = vmatprep.subr.mxu0 0.0
        %343 = vmatpush2.xpose.msra.mxu0 0.0
        %344 = vmatprep.subr.mxu0 0.0
        %345 = vmatpush2.xpose.msra.mxu0 0.0
        %346 = vmatprep.mubr.f32.mxu0 0.0
        %347 = vmatmul.mubr.f32.gmra.mxu0 %v277
        %v348 = vpop.f32.mrf.mxu0
        %v349 = vadd.f32 0.0, %v348
        %v350 = vpop.f32.mrf.mxu0
        %351 = vdwg.mxu0
        %352 = vst.msk [vmem:[%s239] sm:$0xff] %vm275, %v349
        %s353 = smul.u32 %s24, 8
        %v354 = vlaneseq
        %v355 = vshrl.u32 %v354, 7
        %v356 = vstv %s353
        %v357 = vadd.s32 %v356, %v355
        %v358 = vlaneseq
        %v359 = vand.u32 %v358, 127
        %vm360 = vcmp.le.s32.totalorder %v359, %v357
        %v361 = vsel %vm360, %v349, -1e+30
        %v362 = vsel %vm275, %v361, -inf
        %363 = vmax.xlane.f32.xlu0 %v362
        %v364 = vpop.xlane.xlu0 %363
        %v365 = vsub.f32 %v361, %v364
        %v366 = vmul.f32 %v365, 1.442695
        %v367 = vpow.pop %v366
        %v368 = vsel %vm275, %v367, 0.0
        %369 = vadd.xlane.f32.xlu0 %v368
        %v370 = vpop.xlane.xlu0 %369
        %v372 = vsel %vm275, %v367, 0
        %374 = vmatprep.subr.mxu0 0.0
        %375 = vmatpush1.msra.mxu0 0.0
        %376 = vmatprep.subr.mxu0 0.0
        %377 = vmatpush1.msra.mxu0 0.0
        %378 = vmatprep.subr.mxu0 0.0
        %379 = vmatpush1.msra.mxu0 0.0
        %380 = vmatprep.subr.mxu0 0.0
        %381 = vmatpush1.msra.mxu0 0.0
        %382 = vmatprep.subr.mxu0 0.0
        %383 = vmatpush1.msra.mxu0 0.0
        %384 = vmatprep.subr.mxu0 0.0
        %385 = vmatpush1.msra.mxu0 0.0
        %386 = vmatprep.subr.mxu0 0.0
        %387 = vmatpush1.msra.mxu0 0.0
        %388 = vmatprep.subr.mxu0 0.0
        %389 = vmatpush1.msra.mxu0 0.0
        %390 = vmatprep.subr.mxu0 0.0
        %391 = vmatpush1.msra.mxu0 0.0
        %392 = vmatprep.subr.mxu0 0.0
        %393 = vmatpush1.msra.mxu0 0.0
        %394 = vmatprep.subr.mxu0 0.0
        %395 = vmatpush1.msra.mxu0 0.0
        %396 = vmatprep.subr.mxu0 0.0
        %397 = vmatpush1.msra.mxu0 0.0
        %398 = vmatprep.subr.mxu0 0.0
        %399 = vmatpush1.msra.mxu0 0.0
        %400 = vmatprep.subr.mxu0 0.0
        %401 = vmatpush1.msra.mxu0 0.0
        %402 = vmatprep.subr.mxu0 0.0
        %403 = vmatpush1.msra.mxu0 0.0
        %404 = vmatprep.subr.mxu0 0.0
        %405 = vmatpush1.msra.mxu0 %v273
        %406 = vmatprep.subr.mxu0 0.0
        %407 = vmatpush2.msra.mxu0 0.0
        %408 = vmatprep.subr.mxu0 0.0
        %409 = vmatpush2.msra.mxu0 0.0
        %410 = vmatprep.subr.mxu0 0.0
        %411 = vmatpush2.msra.mxu0 0.0
        %412 = vmatprep.subr.mxu0 0.0
        %413 = vmatpush2.msra.mxu0 0.0
        %414 = vmatprep.subr.mxu0 0.0
        %415 = vmatpush2.msra.mxu0 0.0
        %416 = vmatprep.subr.mxu0 0.0
        %417 = vmatpush2.msra.mxu0 0.0
        %418 = vmatprep.subr.mxu0 0.0
        %419 = vmatpush2.msra.mxu0 0.0
        %420 = vmatprep.subr.mxu0 0.0
        %421 = vmatpush2.msra.mxu0 0.0
        %422 = vmatprep.subr.mxu0 0.0
        %423 = vmatpush2.msra.mxu0 0.0
        %424 = vmatprep.subr.mxu0 0.0
        %425 = vmatpush2.msra.mxu0 0.0
        %426 = vmatprep.subr.mxu0 0.0
        %427 = vmatpush2.msra.mxu0 0.0
        %428 = vmatprep.subr.mxu0 0.0
        %429 = vmatpush2.msra.mxu0 0.0
        %430 = vmatprep.subr.mxu0 0.0
        %431 = vmatpush2.msra.mxu0 0.0
        %432 = vmatprep.subr.mxu0 0.0
        %433 = vmatpush2.msra.mxu0 0.0
        %434 = vmatprep.subr.mxu0 0.0
        %435 = vmatpush2.msra.mxu0 0.0
        %436 = vmatprep.subr.mxu0 0.0
        %437 = vmatpush2.msra.mxu0 0.0
        %438 = vmatprep.mubr.f32.mxu0 0.0
        %439 = vmatmul.mubr.f32.gmra.mxu0 %v372
        %v440 = vpop.f32.mrf.mxu0
        %v441 = vadd.f32 0.0, %v440
        %v442 = vpop.f32.mrf.mxu0
        %443 = vdwg.mxu0
        %v444 = vrcp.pop %v370
        %v445 = vmul.f32 %v441, %v444
        %446 = vst.msk [vmem:[%s270] sm:$0xff] %vm275, %v445
        %s447 = sand.u32 %s121, 1
        %s448 = scalar_lea.sflag [#allocation3], %s447
        %s449 = sand.u32 %s121, 1
        %s450 = smul.addr %s449, 8
        %s451 = scalar_lea.vmem [#allocation2], %s450
        %p452 = scmp.lt.s32.totalorder %s23, 7
        %s453 = scalar_select %p452, %s23, 7
        %p454 = scmp.lt.s32.totalorder %s24, 0
        %s455 = scalar_select %p454, %s24, 0
        %s456 = sadd.s32 %s455, %s453
        %s457 = smul.addr %s456, 8
        %s458 = scalar_lea.vmem %s4, %s457
        // Predicated region
        $region33: #{attention_forward.4} parent=31 // pred_check
          %p459 = pneg %p131
        $region34: #{attention_forward.4} parent=31 // pred_check_branch
          %461 = sbr.rel (%p459) target = $region36
        $region35: #{attention_forward.4} parent=31 // pred_region
          %s463 = ssub.s32 128, 128
          %464 = vsyncadd %s448, %s463
          %s465 = sadd.s32 %s24, %s23
          %s466 = smul.addr %s465, 128
          %s467 = scalar_lea.hbm %s3, %s466
          %s469 = sshll.u32 %s451, 4
          %s470 = int_to_ptr.vmem [resolvable:$true] %s469
          %472 = dma.vmem_to_hbm [thread:$0]  %s470, 128, %s467, %s448
        $region36: #{attention_forward.4} parent=31 // pred_fallthru
          _
        // Predicated region
        $region37: #{attention_forward.4} parent=31 // pred_check
          %p473 = pneg %p159
        $region38: #{attention_forward.4} parent=31 // pred_check_branch
          %475 = sbr.rel (%p473) target = $region40
        $region39: #{attention_forward.4} parent=31 // pred_region
          _
        $region40: #{attention_forward.4} parent=31 // pred_fallthru
          _
      $region32: #{attention_forward.4} parent=5 // pred_fallthru
        _
      %p476 = scmp.le.s32.totalorder 2, %s14
      // Predicated region
      $region41: #{attention_forward.4} parent=5 // pred_check
        %p477 = pneg %p476
      $region42: #{attention_forward.4} parent=5 // pred_check_branch
        %479 = sbr.rel (%p477) target = $region44
      $region43: #{attention_forward.4} parent=5 // pred_region
        %s480 = ssub.s32 %s14, 2
        // Predicated region
        $region45: #{attention_forward.4} parent=43 // pred_check
          %p481 = pneg %p137
        $region46: #{attention_forward.4} parent=43 // pred_check_branch
          %483 = sbr.rel (%p481) target = $region48
        $region47: #{attention_forward.4} parent=43 // pred_region
          %s484 = sand.u32 %s122, 1
          %s485 = scalar_lea.sflag [#allocation3], %s484
          %s486 = sand.u32 %s122, 1
          %s487 = smul.addr %s486, 8
          %s488 = scalar_lea.vmem [#allocation2], %s487
          %489 = dma.done %s485, 128
        $region48: #{attention_forward.4} parent=43 // pred_fallthru
          _
        // Predicated region
        $region49: #{attention_forward.4} parent=43 // pred_check
          %p490 = pneg %p165
        $region50: #{attention_forward.4} parent=43 // pred_check_branch
          %492 = sbr.rel (%p490) target = $region52
        $region51: #{attention_forward.4} parent=43 // pred_region
          %p493 = scmp.lt.s32.totalorder %s25, 7
          %s494 = scalar_select %p493, %s25, 7
          %p495 = scmp.lt.s32.totalorder %s26, 0
          %s496 = scalar_select %p495, %s26, 0
          %s497 = sadd.s32 %s496, %s494
          %s498 = smul.addr %s497, 8
          %s499 = scalar_lea.vmem %s4, %s498
        $region52: #{attention_forward.4} parent=43 // pred_fallthru
          _
      $region44: #{attention_forward.4} parent=5 // pred_fallthru
        _
    $region6: #{attention_forward.4} parent=1 // loop_footer
      %s18 = sadd.s32 1, %s14
    $region7: #{attention_forward.4} parent=1 // loop_footer_branch
      %13 = sbr.rel target = $region3
    $region8: #{attention_forward.4} parent=1 // loop_exit
      _
    %500 = vsyncpa [#allocation3], 1
    %s501 = scalar_lea.sflag [#allocation3], 1
    %502 = vsyncpa %s501, 1

</llo_original>
